<compile_context>
chip_gen: v7x
topology: tpu7x:2x2x1
jax: 0.10.0
libtpu: 0.0.40
codegen_flags: <defaults>
</compile_context>

<pallas_src>
import functools

import jax
import jax.numpy as jnp
from jax import lax
from jax.experimental import pallas as pl
from jax.experimental.pallas import tpu as pltpu
import numpy as np

_LANES = 128
_SUBLANES = 8
_CHUNK_ROWS = 512          # in-kernel compute chunk (rows) -> small vreg temporaries


def _hda_kernel(x_ref, out_ref, *, tile_rows, chunk_rows, row_bound, tiles_per_part):
    # x_ref:   (tile_rows, 128) block of the lane-dense flattened input
    # out_ref: (1, 8, 128) f32 per-stream partial-sum block (resident across t)
    p = pl.program_id(0)                 # stream index ("parallel", one per TC on v7x)
    t = pl.program_id(1)                 # tile index within stream ("arbitrary")

    @pl.when(t == 0)
    def _init():
        out_ref[...] = jnp.zeros_like(out_ref)

    g = p * tiles_per_part + t           # logical tile id (may overshoot the last tile)
    row0 = g * tile_rows
    n_chunks = tile_rows // chunk_rows

    def _accumulate(masked):
        def body(c, acc):
            start = pl.multiple_of(c * chunk_rows, _SUBLANES)
            vals = jnp.abs(x_ref[pl.ds(start, chunk_rows), :]).astype(jnp.float32)
            if masked:
                rid = lax.broadcasted_iota(jnp.int32, (chunk_rows, _LANES), 0)
                limit = row_bound - (row0 + c * chunk_rows)
                vals = jnp.where(rid < limit, vals, 0.0)
            # (chunk, 128) -> (chunk/8, 8, 128): leading-axis sum is pure
            # full-vreg VPU adds; no per-step cross-sublane/lane XLU reduce.
            return acc + jnp.sum(
                vals.reshape(chunk_rows // _SUBLANES, _SUBLANES, _LANES), axis=0)

        acc = lax.fori_loop(0, n_chunks, body,
                            jnp.zeros((_SUBLANES, _LANES), jnp.float32))
        out_ref[...] += acc[None]

    is_full = (row0 + tile_rows) <= row_bound

    @pl.when(is_full)
    def _hot():                          # interior tiles: no masking work
        _accumulate(masked=False)

    @pl.when(jnp.logical_not(is_full))
    def _ragged():                       # last / overshoot tile: mask rows >= row_bound
        _accumulate(masked=True)


def hda_loss(focals_all, coeff=1.0, block_bytes=4 * 1024 * 1024):
    """Pallas TPU implementation of HDALoss.forward: coeff * mean(|focals_all|)."""
    x = jnp.ravel(focals_all)            # keep native dtype (halves HBM bytes for bf16)
    m = x.size
    itemsize = jnp.dtype(x.dtype).itemsize

    # Minimal padding: only up to the next (8 x 128)-element granule so the flat
    # buffer can be viewed as (rows, 128).  For m % 1024 == 0 (typical NN tensor
    # sizes) this path is a zero-copy reshape; the padded zeros contribute
    # nothing to the |x| sum and we divide by the true element count m.
    rows = pl.cdiv(m, _SUBLANES * _LANES) * _SUBLANES        # multiple of 8
    padded = rows * _LANES
    if padded != m:
        x = jnp.pad(x, (0, padded - m))
    x2d = x.reshape(rows, _LANES)

    # Bytes-based tile: ~block_bytes per DMA block (f32 -> 8192 rows,
    # bf16 -> 16384 rows), consumed in-kernel in _CHUNK_ROWS-row chunks.
    if rows <= _CHUNK_ROWS:
        tile_rows = chunk_rows = rows                        # tiny input: one exact block
    else:
        chunk_rows = _CHUNK_ROWS
        target = max(chunk_rows,
                     (block_bytes // (_LANES * itemsize)) // chunk_rows * chunk_rows)
        tile_rows = min(target, pl.cdiv(rows, chunk_rows) * chunk_rows)

    total_tiles = pl.cdiv(rows, tile_rows)
    num_parts = 2 if total_tiles >= 2 else 1                 # v7x: one stream per TC
    tiles_per_part = pl.cdiv(total_tiles, num_parts)

    kernel = functools.partial(
        _hda_kernel, tile_rows=tile_rows, chunk_rows=chunk_rows,
        row_bound=rows, tiles_per_part=tiles_per_part)

    in_spec = pl.BlockSpec(
        (tile_rows, _LANES),
        # Clamp so an overshooting (p, t) point re-reads a valid tile; its
        # contribution is fully masked out in-kernel.
        lambda p, t: (jnp.minimum(p * tiles_per_part + t, total_tiles - 1), 0))
    out_spec = pl.BlockSpec((1, _SUBLANES, _LANES), lambda p, t: (p, 0, 0))

    partials = pl.pallas_call(
        kernel,
        out_shape=jax.ShapeDtypeStruct((num_parts, _SUBLANES, _LANES), jnp.float32),
        grid=(num_parts, tiles_per_part),
        in_specs=[in_spec],
        out_specs=out_spec,
        compiler_params=pltpu.CompilerParams(
            dimension_semantics=("parallel", "arbitrary")),
        cost_estimate=pl.CostEstimate(
            flops=2 * m, transcendentals=0,
            bytes_accessed=padded * itemsize + num_parts * _SUBLANES * _LANES * 4),
    )(x2d)

    # Tiny (num_parts, 8, 128) final reduce + normalization outside the kernel;
    # coeff may be a Python scalar or a traced value (no recompile per value).
    return coeff * (jnp.sum(partials) / m)


def _reference(focals_all, coeff=1.0):
    """Pure-JAX reference mirroring the PyTorch forward."""
    return coeff * jnp.mean(jnp.abs(focals_all.astype(jnp.float32)))


if __name__ == "__main__":
    key = jax.random.PRNGKey(0)
    k1, k2, k3, k4 = jax.random.split(key, 4)

    # Main case: (batch=2, channels=4, 16x16) float32 -> single exact tile.
    focals_all = jax.random.normal(k1, (2, 4, 16, 16), dtype=jnp.float32)
    out = jax.block_until_ready(hda_loss(focals_all, coeff=1.0))
    ref = jax.block_until_ready(_reference(focals_all, 1.0))
    np.testing.assert_allclose(np.asarray(out), np.asarray(ref), rtol=1e-5, atol=1e-6)

    # Odd size -> exercises the minimal (8x128) zero-pad path.
    x2 = jax.random.normal(k2, (3, 5, 7), dtype=jnp.float32)
    out2 = jax.block_until_ready(hda_loss(x2, coeff=0.5))
    ref2 = jax.block_until_ready(_reference(x2, 0.5))
    np.testing.assert_allclose(np.asarray(out2), np.asarray(ref2), rtol=1e-5, atol=1e-6)

    # bf16 input kept in native dtype (HBM bytes halved), multi-chunk inner loop.
    x3 = jax.random.normal(k3, (8, 4, 64, 64), dtype=jnp.float32).astype(jnp.bfloat16)
    out3 = jax.block_until_ready(hda_loss(x3, coeff=1.0))
    ref3 = jax.block_until_ready(_reference(x3, 1.0))
    np.testing.assert_allclose(np.asarray(out3), np.asarray(ref3), rtol=2e-3, atol=2e-3)

    # Non-1024-multiple size with a small block_bytes -> exercises the two-stream
    # "parallel" grid, the clamped overshoot tile, and the in-kernel ragged mask.
    x4 = jax.random.normal(k4, (3, 11, 100, 40), dtype=jnp.float32)
    out4 = jax.block_until_ready(hda_loss(x4, coeff=2.0, block_bytes=256 * 1024))
    ref4 = jax.block_until_ready(_reference(x4, 2.0))
    np.testing.assert_allclose(np.asarray(out4), np.asarray(ref4), rtol=5e-5, atol=1e-6)

    print("KERNEL_OK")
</pallas_src>

<mosaic_0001>
module attributes {stable_mosaic.version = 11 : i64} {
  func.func @_hda_kernel(%arg0: i32, %arg1: i32, %arg2: memref<16x128xf32, #tpu.memory_space<vmem>>, %arg3: memref<1x8x128xf32, #tpu.memory_space<vmem>>) attributes {dimension_semantics = [#tpu.dimension_semantics<parallel>, #tpu.dimension_semantics<arbitrary>], iteration_bounds = array<i64: 1, 1>, scalar_prefetch = 0 : i64, scratch_operands = 0 : i64, tpu.core_type = #tpu.core_type<tc>, window_params = [{transform_indices = @transform_0, window_bounds = array<i64: 16, 128>}, {transform_indices = @transform_1, window_bounds = array<i64: 1, 8, 128>}]} {
    %c0_i32 = arith.constant 0 : i32
    %0 = arith.cmpi eq, %arg1, %c0_i32 : i32
    %1 = arith.extui %0 : i1 to i32
    %c0_i32_0 = arith.constant 0 : i32
    %2 = arith.cmpi ne, %1, %c0_i32_0 : i32
    scf.if %2 {
      %cst = arith.constant 0.000000e+00 : f32
      %13 = vector.broadcast %cst : f32 to vector<1x8x128xf32>
      %c0 = arith.constant 0 : index
      %c0_5 = arith.constant 0 : index
      %c0_6 = arith.constant 0 : index
      %14 = vector.load %arg3[%c0, %c0_5, %c0_6] : memref<1x8x128xf32, #tpu.memory_space<vmem>>, vector<1x8x128xf32>
      tpu.vector_store %arg3[%c0, %c0_5, %c0_6], %13 {strides = array<i32>} : memref<1x8x128xf32, #tpu.memory_space<vmem>>, vector<1x8x128xf32>,
    } else {
    }
    %c1_i32 = arith.constant 1 : i32
    %3 = arith.muli %arg0, %c1_i32 : i32
    %4 = arith.addi %3, %arg1 : i32
    %c16_i32 = arith.constant 16 : i32
    %5 = arith.muli %4, %c16_i32 : i32
    %c16_i32_1 = arith.constant 16 : i32
    %6 = arith.addi %5, %c16_i32_1 : i32
    %c16_i32_2 = arith.constant 16 : i32
    %7 = arith.cmpi sle, %6, %c16_i32_2 : i32
    %8 = arith.extui %7 : i1 to i32
    %c0_i32_3 = arith.constant 0 : i32
    %9 = arith.cmpi ne, %8, %c0_i32_3 : i32
    scf.if %9 {
      %cst = arith.constant 0.000000e+00 : f32
      %13 = vector.broadcast %cst : f32 to vector<8x128xf32>
      %c0_i32_5 = arith.constant 0 : i32
      %c16_i32_6 = arith.constant 16 : i32
      %14 = arith.muli %c0_i32_5, %c16_i32_6 : i32
      %15 = tpu.assume_multiple %14, 8 : i32
      %16 = arith.index_cast %15 : i32 to index
      %c0 = arith.constant 0 : index
      %17 = vector.load %arg2[%16, %c0] : memref<16x128xf32, #tpu.memory_space<vmem>>, vector<16x128xf32>
      %18 = math.absf %17 : vector<16x128xf32>
      %19 = vector.shape_cast %18 : vector<16x128xf32> to vector<2x8x128xf32>
      %cst_7 = arith.constant dense<0.000000e+00> : vector<8x128xf32>
      %20 = vector.multi_reduction <add>, %19, %cst_7 [0] : vector<2x8x128xf32> to vector<8x128xf32>
      %21 = arith.addf %13, %20 : vector<8x128xf32>
      %c1_i32_8 = arith.constant 1 : i32
      %c0_9 = arith.constant 0 : index
      %c0_10 = arith.constant 0 : index
      %c0_11 = arith.constant 0 : index
      %22 = vector.load %arg3[%c0_9, %c0_10, %c0_11] : memref<1x8x128xf32, #tpu.memory_space<vmem>>, vector<1x8x128xf32>
      %23 = vector.shape_cast %21 : vector<8x128xf32> to vector<1x8x128xf32>
      %24 = arith.addf %22, %23 : vector<1x8x128xf32>
      %c0_12 = arith.constant 0 : index
      %c0_13 = arith.constant 0 : index
      %c0_14 = arith.constant 0 : index
      %25 = vector.load %arg3[%c0_12, %c0_13, %c0_14] : memref<1x8x128xf32, #tpu.memory_space<vmem>>, vector<1x8x128xf32>
      tpu.vector_store %arg3[%c0_12, %c0_13, %c0_14], %24 {strides = array<i32>} : memref<1x8x128xf32, #tpu.memory_space<vmem>>, vector<1x8x128xf32>,
    } else {
    }
    %true = arith.constant true
    %10 = arith.xori %7, %true : i1
    %11 = arith.extui %10 : i1 to i32
    %c0_i32_4 = arith.constant 0 : i32
    %12 = arith.cmpi ne, %11, %c0_i32_4 : i32
    scf.if %12 {
      %cst = arith.constant 0.000000e+00 : f32
      %13 = vector.broadcast %cst : f32 to vector<8x128xf32>
      %c0_i32_5 = arith.constant 0 : i32
      %c16_i32_6 = arith.constant 16 : i32
      %14 = arith.muli %c0_i32_5, %c16_i32_6 : i32
      %15 = tpu.assume_multiple %14, 8 : i32
      %16 = arith.index_cast %15 : i32 to index
      %c0 = arith.constant 0 : index
      %17 = vector.load %arg2[%16, %c0] : memref<16x128xf32, #tpu.memory_space<vmem>>, vector<16x128xf32>
      %18 = math.absf %17 : vector<16x128xf32>
      %19 = tpu.iota {dimensions = array<i32: 0>} : vector<16x128xi32>
      %c16_i32_7 = arith.constant 16 : i32
      %20 = arith.muli %c0_i32_5, %c16_i32_7 : i32
      %21 = arith.addi %5, %20 : i32
      %c16_i32_8 = arith.constant 16 : i32
      %22 = arith.subi %c16_i32_8, %21 : i32
      %23 = vector.broadcast %22 : i32 to vector<16x128xi32>
      %24 = arith.cmpi slt, %19, %23 : vector<16x128xi32>
      %cst_9 = arith.constant 0.000000e+00 : f32
      %25 = vector.broadcast %cst_9 : f32 to vector<16x128xf32>
      %26 = arith.select %24, %18, %25 : vector<16x128xi1>, vector<16x128xf32>
      %27 = vector.shape_cast %26 : vector<16x128xf32> to vector<2x8x128xf32>
      %cst_10 = arith.constant dense<0.000000e+00> : vector<8x128xf32>
      %28 = vector.multi_reduction <add>, %27, %cst_10 [0] : vector<2x8x128xf32> to vector<8x128xf32>
      %29 = arith.addf %13, %28 : vector<8x128xf32>
      %c1_i32_11 = arith.constant 1 : i32
      %c0_12 = arith.constant 0 : index
      %c0_13 = arith.constant 0 : index
      %c0_14 = arith.constant 0 : index
      %30 = vector.load %arg3[%c0_12, %c0_13, %c0_14] : memref<1x8x128xf32, #tpu.memory_space<vmem>>, vector<1x8x128xf32>
      %31 = vector.shape_cast %29 : vector<8x128xf32> to vector<1x8x128xf32>
      %32 = arith.addf %30, %31 : vector<1x8x128xf32>
      %c0_15 = arith.constant 0 : index
      %c0_16 = arith.constant 0 : index
      %c0_17 = arith.constant 0 : index
      %33 = vector.load %arg3[%c0_15, %c0_16, %c0_17] : memref<1x8x128xf32, #tpu.memory_space<vmem>>, vector<1x8x128xf32>
      tpu.vector_store %arg3[%c0_15, %c0_16, %c0_17], %32 {strides = array<i32>} : memref<1x8x128xf32, #tpu.memory_space<vmem>>, vector<1x8x128xf32>,
    } else {
    }
    return
  }
  func.func @transform_0(%arg0: i32, %arg1: i32) -> (i32, i32) {
    %c1_i32 = arith.constant 1 : i32
    %0 = arith.muli %arg0, %c1_i32 : i32
    %1 = arith.addi %0, %arg1 : i32
    %c0_i32 = arith.constant 0 : i32
    %2 = arith.minsi %1, %c0_i32 : i32
    %c0_i32_0 = arith.constant 0 : i32
    %c0_i32_1 = arith.constant 0 : i32
    return %2, %c0_i32_0 : i32, i32
  }
  func.func @transform_1(%arg0: i32, %arg1: i32) -> (i32, i32, i32) {
    %c0_i32 = arith.constant 0 : i32
    %c0_i32_0 = arith.constant 0 : i32
    %c0_i32_1 = arith.constant 0 : i32
    return %arg0, %c0_i32, %c0_i32_0 : i32, i32, i32
  }
}

</mosaic_0001>

<llo_original>
// kernel: tpu_custom_call.1
$region0: #{tpu_custom_call.1}
  #allocation0 [shape = 'u32[]', space=smem, size = 0x4, offset = 0x4, fixed_abs, tag = 'smem constant byte address 0x4 - core index']
  #allocation1 [shape = 'u32[144,128]{1,0:T(1,128)}', space=vmem, size = 0x12000, scoped, tag = 'internal scratch']
  %s0 = inlined_call_operand.hbm [shape: f32[16,128], index: 0, kind: input, shape index: {}]
  %s1 = inlined_call_operand.hbm [shape: f32[1,8,128], index: 1, kind: output, shape index: {}]
  %s2 = sld [smem:[#allocation0]]
  $region30: #{tpu_custom_call.1} parent=0
    _
  %s4 = ssub.s32 1, %s2
  %s5 = scalar_select 0, %s4, %s2
  $region1: #{tpu_custom_call.1} parent=0
    #allocation2 [shape = 'u8[8192]{0}', space=vmem, size = 0x2000, scoped, tag = 'input window, operand 0, single buffered']
    #allocation3 [shape = 's32[1]{0}', space=sflag, size = 0x4, scoped, tag = 'scoped memory for tpu_custom_call.1']
    #allocation4 [shape = 's32[1]{0}', space=sflag, size = 0x4, scoped, tag = 'scoped memory for tpu_custom_call.1']
    #allocation5 [shape = 'u8[4096]{0}', space=vmem, size = 0x1000, scoped, tag = 'output window, operand 0, single buffered']
    %6 = vsyncpa [#allocation3], 0
    %7 = vsyncpa [#allocation4], 0
    // Predicated region
    $region2: #{tpu_custom_call.1} parent=1 // pred_check
      _
    $region3: #{tpu_custom_call.1} parent=1 // pred_check_branch
      %9 = sbr.rel (0) target = $region5
    $region4: #{tpu_custom_call.1} parent=1 // pred_region
      %s10 = sadd.s32 0, 0
      %p11 = scmp.lt.s32.totalorder %s10, 0
      %s12 = scalar_select %p11, %s10, 0
      %s13 = smul.u32 2, %s12
      %s15 = ssub.s32 256, 256
      %16 = vsyncadd [#allocation3], %s15
      %s17 = smul.addr %s13, 128
      %s18 = scalar_lea.hbm %s0, %s17
      %s19 = sshll.u32 [#allocation2], 4
      %s20 = int_to_ptr.vmem [resolvable:$true] %s19
      %25 = dma.hbm_to_vmem [thread:$0]  %s18, 256, %s20, [#allocation3], 128, 128, 8
    $region5: #{tpu_custom_call.1} parent=1 // pred_fallthru
      _
    // Predicated region
    $region6: #{tpu_custom_call.1} parent=1 // pred_check
      _
    $region7: #{tpu_custom_call.1} parent=1 // pred_check_branch
      %27 = sbr.rel (0) target = $region9
    $region8: #{tpu_custom_call.1} parent=1 // pred_region
      %28 = dma.done [#allocation3], 256
    $region9: #{tpu_custom_call.1} parent=1 // pred_fallthru
      _
    %s29 = sadd.s32 0, 0
    %p30 = scmp.lt.s32.totalorder %s29, 0
    %s31 = scalar_select %p30, %s29, 0
    %s32 = smul.u32 2, %s31
    %p33 = scmp.eq.s32.totalorder 0, 0
    // Predicated region
    $region10: #{tpu_custom_call.1} parent=1 // pred_check
      %p34 = pneg %p33
    $region11: #{tpu_custom_call.1} parent=1 // pred_check_branch
      %36 = sbr.rel (%p34) target = $region13
    $region12: #{tpu_custom_call.1} parent=1 // pred_region
      %37 = vst [vmem:[#allocation5] sm:$0xff] 0.0
    $region13: #{tpu_custom_call.1} parent=1 // pred_fallthru
      _
    %s38 = sadd.s32 0, 0
    %s39 = smul.u32 %s38, 16
    %s40 = sadd.s32 %s39, 16
    %p41 = scmp.le.s32.totalorder %s40, 16
    // Predicated region
    $region14: #{tpu_custom_call.1} parent=1 // pred_check
      %p42 = pneg %p41
    $region15: #{tpu_custom_call.1} parent=1 // pred_check_branch
      %44 = sbr.rel (%p42) target = $region17
    $region16: #{tpu_custom_call.1} parent=1 // pred_region
      %v45 = vld [vmem:[#allocation2] sm:$0xff]
      %v46 = vld [vmem:[#allocation2 + $0x8] sm:$0xff]
      %v47 = vand.u32 2147483647, %v45
      %v48 = vand.u32 2147483647, %v46
      %v49 = vadd.f32 %v47, %v48
      %v50 = vadd.f32 %v49, 0.0
      %v51 = vld [vmem:[#allocation5] sm:$0xff]
      %v52 = vadd.f32 %v51, %v50
      %53 = vst [vmem:[#allocation5] sm:$0xff] %v52
    $region17: #{tpu_custom_call.1} parent=1 // pred_fallthru
      _
    %p54 = scmp.gt.s32.totalorder %s40, 16
    // Predicated region
    $region18: #{tpu_custom_call.1} parent=1 // pred_check
      %p55 = pneg %p54
    $region19: #{tpu_custom_call.1} parent=1 // pred_check_branch
      %57 = sbr.rel (%p55) target = $region21
    $region20: #{tpu_custom_call.1} parent=1 // pred_region
      %v58 = vld [vmem:[#allocation2] sm:$0xff]
      %v59 = vld [vmem:[#allocation2 + $0x8] sm:$0xff]
      %v60 = vand.u32 2147483647, %v58
      %v61 = vand.u32 2147483647, %v59
      %v62 = vlaneseq
      %v63 = vshrl.u32 %v62, 7
      %v64 = vadd.s32 %v63, 8
      %s65 = ssub.s32 16, %s39
      %v66 = vstv %s65
      %vm67 = vcmp.lt.s32.totalorder %v63, %v66
      %vm68 = vcmp.lt.s32.totalorder %v64, %v66
      %v69 = vsel %vm67, %v60, 0.0
      %v70 = vsel %vm68, %v61, 0.0
      %v71 = vadd.f32 %v69, %v70
      %v72 = vadd.f32 %v71, 0.0
      %v73 = vld [vmem:[#allocation5] sm:$0xff]
      %v74 = vadd.f32 %v73, %v72
      %75 = vst [vmem:[#allocation5] sm:$0xff] %v74
    $region21: #{tpu_custom_call.1} parent=1 // pred_fallthru
      _
    // Predicated region
    $region22: #{tpu_custom_call.1} parent=1 // pred_check
      _
    $region23: #{tpu_custom_call.1} parent=1 // pred_check_branch
      %77 = sbr.rel (0) target = $region25
    $region24: #{tpu_custom_call.1} parent=1 // pred_region
      %s79 = ssub.s32 128, 128
      %80 = vsyncadd [#allocation4], %s79
      %s82 = sshll.u32 [#allocation5], 4
      %s83 = int_to_ptr.vmem [resolvable:$true] %s82
      %85 = dma.vmem_to_hbm [thread:$0]  %s83, 128, %s1, [#allocation4]
    $region25: #{tpu_custom_call.1} parent=1 // pred_fallthru
      _
    // Predicated region
    $region26: #{tpu_custom_call.1} parent=1 // pred_check
      _
    $region27: #{tpu_custom_call.1} parent=1 // pred_check_branch
      %87 = sbr.rel (0) target = $region29
    $region28: #{tpu_custom_call.1} parent=1 // pred_region
      %88 = dma.done [#allocation4], 128
    $region29: #{tpu_custom_call.1} parent=1 // pred_fallthru
      _
    %89 = vsyncpa [#allocation3], 1
    %90 = vsyncpa [#allocation4], 1

</llo_original>
